<compile_context>
chip_gen: v6e
topology: v6e:2x2x1
jax: 0.10.0
libtpu: 0.0.40
codegen_flags: <defaults>
</compile_context>

<pallas_src>
import functools

import jax
import jax.numpy as jnp
from jax.experimental import pallas as pl
from jax.experimental.pallas import tpu as pltpu


def _round_up(a, b):
    return ((a + b - 1) // b) * b


def _ffn_kernel(x_ref, w1_ref, b1_ref, w2_ref, b2_ref, o_ref, acc_ref):
    # x_ref : (tm, D)  bf16     w1_ref: (D, tH) bf16     b1_ref: (1, tH) f32
    # w2_ref: (tH, O)  bf16     b2_ref: (1, O)  f32
    # o_ref : (tm, O)  out dtype   acc_ref: (tm, O) f32 scratch (lives across h steps)
    h_idx = pl.program_id(1)

    @pl.when(h_idx == 0)
    def _init():
        acc_ref[...] = jnp.zeros_like(acc_ref)

    # fc1 chunk: bf16 x bf16 MXU matmul with f32 accumulation, + f32 bias chunk.
    h = jnp.dot(x_ref[...], w1_ref[...],
                preferred_element_type=jnp.float32) + b1_ref[...]

    # GELU, tanh approximation (tanh runs on the EUP slot, overlaps with MXU work).
    # TODO(synk): nn.GELU() default is the exact erf form; tanh approx differs ~1e-3.
    c = 0.7978845608028654  # sqrt(2/pi)
    g = 0.5 * h * (1.0 + jnp.tanh(c * (h + 0.044715 * h * h * h)))

    # TODO(synk): nn.Dropout is identity at inference; training-mode masking would use
    # pltpu.prng_seed / pltpu.prng_random_bits with a scaled keep-mask here.

    # fc2 partial: bf16 x bf16 matmul, accumulate into the f32 scratch (output block
    # index is constant along the h axis -> standard accumulator pattern).
    acc_ref[...] += jnp.dot(g.astype(w2_ref.dtype), w2_ref[...],
                            preferred_element_type=jnp.float32)

    @pl.when(h_idx == pl.num_programs(1) - 1)
    def _finalize():
        o_ref[...] = (acc_ref[...] + b2_ref[...]).astype(o_ref.dtype)


@functools.partial(jax.jit, static_argnames=("block_m", "block_h"))
def feed_forward(x, w1_t, b1, w2_t, b2, *, block_m=256, block_h=512):
    """
    x    : (..., D)
    w1_t : (D, H) = fc1.weight.T     b1 : (1, H) or (H,)
    w2_t : (H, O) = fc2.weight.T     b2 : (1, O) or (O,)
    returns (..., O) in x.dtype   (dropout in eval mode == identity)
    """
    D = x.shape[-1]
    H = w1_t.shape[1]
    O = w2_t.shape[1]
    lead = x.shape[:-1]
    out_dtype = x.dtype                      # match the module's activation dtype
    compute_dtype = jnp.bfloat16             # native MXU dtype on v5e/v6e/v7x

    x2 = x.reshape(-1, D).astype(compute_dtype)
    w1c = w1_t.astype(compute_dtype)
    w2c = w2_t.astype(compute_dtype)
    b1c = b1.reshape(1, H).astype(jnp.float32)   # biases stay f32 (added on f32 acc)
    b2c = b2.reshape(1, O).astype(jnp.float32)

    m = x2.shape[0]
    m8 = _round_up(m, 8)

    # Row tile: single tile for small problems; otherwise split so grid_m >= 2 (keeps
    # both v7x TensorCores busy via the "parallel" M axis).
    if m8 <= block_m:
        tm = m8
    elif m8 < 2 * block_m:
        tm = _round_up(pl.cdiv(m8, 2), 8)
    else:
        tm = block_m
    mp = _round_up(m8, tm)
    # TODO(synk): handle the ragged last row-tile in-kernel (masked store) instead of
    # padding; jnp.pad is an extra HBM pass over x when m is far from a tile multiple.
    if mp != m:
        x2 = jnp.pad(x2, ((0, mp - m), (0, 0)))
    grid_m = mp // tm

    # Hidden tile: stream w1 column-tiles / w2 row-tiles so full weights never need
    # VMEM residency.  tH must be a multiple of 128 (lanes) that divides H, else fall
    # back to the full H (fine for small/moderate hidden dims).
    if H <= block_h:
        tH = H
    else:
        tH = H  # fallback: full residency
        cand = (block_h // 128) * 128
        while cand >= 128:
            if H % cand == 0:
                tH = cand
                break
            cand -= 128
        # TODO(synk): pad H with zero columns/rows for pathological hidden sizes.
    grid_h = H // tH

    # Explicit scoped-VMEM budget (defaults are 16/32 MiB and reject realistic sizes).
    cbytes = jnp.dtype(compute_dtype).itemsize
    obytes = jnp.dtype(out_dtype).itemsize
    vmem_bytes = (
        2 * tm * D * cbytes        # x tile (double buffered)
        + 2 * D * tH * cbytes      # w1 tile
        + 2 * tH * 4               # b1 tile
        + 2 * tH * O * cbytes      # w2 tile
        + 2 * O * 4                # b2 tile
        + 2 * tm * O * obytes      # output tile
        + tm * O * 4               # f32 accumulator scratch
    )
    vmem_limit = int(min(max(2 * vmem_bytes, 32 * 1024 * 1024), 64 * 1024 * 1024))

    out = pl.pallas_call(
        _ffn_kernel,
        out_shape=jax.ShapeDtypeStruct((mp, O), out_dtype),
        grid_spec=pltpu.PrefetchScalarGridSpec(
            num_scalar_prefetch=0,
            grid=(grid_m, grid_h),
            in_specs=[
                pl.BlockSpec((tm, D), lambda i, h: (i, 0)),    # x row tile (const over h)
                pl.BlockSpec((D, tH), lambda i, h: (0, h)),    # w1 column tile
                pl.BlockSpec((1, tH), lambda i, h: (0, h)),    # b1 chunk
                pl.BlockSpec((tH, O), lambda i, h: (h, 0)),    # w2 row tile
                pl.BlockSpec((1, O), lambda i, h: (0, 0)),     # b2 (constant)
            ],
            out_specs=pl.BlockSpec((tm, O), lambda i, h: (i, 0)),
            scratch_shapes=[pltpu.VMEM((tm, O), jnp.float32)],
        ),
        compiler_params=pltpu.CompilerParams(
            dimension_semantics=("parallel", "arbitrary"),
            vmem_limit_bytes=vmem_limit,
        ),
        cost_estimate=pl.CostEstimate(
            flops=2 * mp * D * H + 2 * mp * H * O,
            transcendentals=mp * H,
            bytes_accessed=(mp * D * cbytes + D * H * cbytes + H * O * cbytes
                            + H * 4 + O * 4 + mp * O * obytes),
        ),
    )(x2, w1c, b1c, w2c, b2c)

    if mp != m:
        out = out[:m]
    return out.reshape(*lead, O)


def init_ffn_params(key, dim, hidden_dim, out_dim=None):
    """Mimics nn.Linear init: uniform(-1/sqrt(fan_in), 1/sqrt(fan_in)).  Weights stored
    pre-transposed (fan_in, fan_out) and in bf16 (native MXU dtype; halves weight DMA
    and VMEM).  Biases kept f32 (added on the f32 accumulator)."""
    if out_dim is None:
        out_dim = dim
    k1, k2, k3, k4 = jax.random.split(key, 4)
    bound1 = float(dim) ** -0.5
    bound2 = float(hidden_dim) ** -0.5
    w1_t = jax.random.uniform(k1, (dim, hidden_dim), jnp.float32,
                              -bound1, bound1).astype(jnp.bfloat16)
    b1 = jax.random.uniform(k2, (1, hidden_dim), jnp.float32, -bound1, bound1)
    w2_t = jax.random.uniform(k3, (hidden_dim, out_dim), jnp.float32,
                              -bound2, bound2).astype(jnp.bfloat16)
    b2 = jax.random.uniform(k4, (1, out_dim), jnp.float32, -bound2, bound2)
    return w1_t, b1, w2_t, b2


if __name__ == "__main__":
    dim, hidden_dim = 128, 256          # out_dim defaults to dim (as in the module)
    batch, seq = 2, 8
    dropout = 0.1                        # identity at inference

    key = jax.random.PRNGKey(0)
    kx, kp = jax.random.split(key)
    x = jax.random.normal(kx, (batch, seq, dim), jnp.float32)
    w1_t, b1, w2_t, b2 = init_ffn_params(kp, dim, hidden_dim)

    y = feed_forward(x, w1_t, b1, w2_t, b2)
    y = jax.block_until_ready(y)
    assert y.shape == (batch, seq, dim)
    assert y.dtype == x.dtype

    # Pure-JAX reference with the same numerics (bf16 MXU operands, f32 accumulation,
    # tanh-GELU, eval-mode dropout).
    def ref_fn(xi):
        xb = xi.astype(jnp.bfloat16)
        h = jnp.dot(xb, w1_t, preferred_element_type=jnp.float32) + b1
        c = 0.7978845608028654
        g = 0.5 * h * (1.0 + jnp.tanh(c * (h + 0.044715 * h * h * h)))
        o = jnp.dot(g.astype(jnp.bfloat16), w2_t,
                    preferred_element_type=jnp.float32) + b2
        return o.astype(x.dtype)

    ref = ref_fn(x.reshape(-1, dim)).reshape(batch, seq, dim)
    assert jnp.allclose(y, ref, atol=2e-2, rtol=2e-2), "mismatch vs reference"

    print("KERNEL_OK")
</pallas_src>

<mosaic_0001>
module attributes {stable_mosaic.version = 11 : i64} {
  func.func @_ffn_kernel(%arg0: i32, %arg1: i32, %arg2: memref<16x128xbf16, #tpu.memory_space<vmem>>, %arg3: memref<128x256xbf16, #tpu.memory_space<vmem>>, %arg4: memref<1x256xf32, #tpu.memory_space<vmem>>, %arg5: memref<256x128xbf16, #tpu.memory_space<vmem>>, %arg6: memref<1x128xf32, #tpu.memory_space<vmem>>, %arg7: memref<16x128xf32, #tpu.memory_space<vmem>>, %arg8: memref<16x128xf32, #tpu.memory_space<vmem>>) attributes {dimension_semantics = [#tpu.dimension_semantics<parallel>, #tpu.dimension_semantics<arbitrary>], iteration_bounds = array<i64: 1, 1>, scalar_prefetch = 0 : i64, scratch_operands = 1 : i64, tpu.core_type = #tpu.core_type<tc>, window_params = [{transform_indices = @transform_0, window_bounds = array<i64: 16, 128>}, {transform_indices = @transform_1, window_bounds = array<i64: 128, 256>}, {transform_indices = @transform_2, window_bounds = array<i64: 1, 256>}, {transform_indices = @transform_3, window_bounds = array<i64: 256, 128>}, {pipeline_mode = #tpu.pipeline_mode<synchronous>, transform_indices = @transform_4, window_bounds = array<i64: 1, 128>}, {transform_indices = @transform_5, window_bounds = array<i64: 16, 128>}]} {
    %c0_i32 = arith.constant 0 : i32
    %0 = arith.cmpi eq, %arg1, %c0_i32 : i32
    %1 = arith.extui %0 : i1 to i32
    %c0_i32_0 = arith.constant 0 : i32
    %2 = arith.cmpi ne, %1, %c0_i32_0 : i32
    scf.if %2 {
      %cst_19 = arith.constant 0.000000e+00 : f32
      %31 = vector.broadcast %cst_19 : f32 to vector<16x128xf32>
      %c0_20 = arith.constant 0 : index
      %c0_21 = arith.constant 0 : index
      %32 = vector.load %arg8[%c0_20, %c0_21] : memref<16x128xf32, #tpu.memory_space<vmem>>, vector<16x128xf32>
      tpu.vector_store %arg8[%c0_20, %c0_21], %31 {strides = array<i32>} : memref<16x128xf32, #tpu.memory_space<vmem>>, vector<16x128xf32>,
    } else {
    }
    %c0 = arith.constant 0 : index
    %c0_1 = arith.constant 0 : index
    %3 = vector.load %arg2[%c0, %c0_1] : memref<16x128xbf16, #tpu.memory_space<vmem>>, vector<16x128xbf16>
    %c0_2 = arith.constant 0 : index
    %c0_3 = arith.constant 0 : index
    %4 = vector.load %arg3[%c0_2, %c0_3] : memref<128x256xbf16, #tpu.memory_space<vmem>>, vector<128x256xbf16>
    %cst = arith.constant dense<0.000000e+00> : vector<16x256xf32>
    %5 = tpu.matmul %3, %4, %cst {dimension_numbers = #tpu.dot_dimension_numbers<[1], [0], [0], [1], [0, 0, 1, 1], [], []>} : vector<16x128xbf16>, vector<128x256xbf16>, vector<16x256xf32> -> vector<16x256xf32>
    %c0_4 = arith.constant 0 : index
    %c0_5 = arith.constant 0 : index
    %6 = vector.load %arg4[%c0_4, %c0_5] : memref<1x256xf32, #tpu.memory_space<vmem>>, vector<1x256xf32>
    %7 = vector.broadcast %6 : vector<1x256xf32> to vector<16x256xf32>
    %8 = arith.addf %5, %7 : vector<16x256xf32>
    %cst_6 = arith.constant 5.000000e-01 : f32
    %9 = vector.broadcast %cst_6 : f32 to vector<16x256xf32>
    %10 = arith.mulf %9, %8 : vector<16x256xf32>
    %cst_7 = arith.constant 4.471500e-02 : f32
    %11 = vector.broadcast %cst_7 : f32 to vector<16x256xf32>
    %12 = arith.mulf %11, %8 : vector<16x256xf32>
    %13 = arith.mulf %12, %8 : vector<16x256xf32>
    %14 = arith.mulf %13, %8 : vector<16x256xf32>
    %15 = arith.addf %8, %14 : vector<16x256xf32>
    %cst_8 = arith.constant 0.797884583 : f32
    %16 = vector.broadcast %cst_8 : f32 to vector<16x256xf32>
    %17 = arith.mulf %16, %15 : vector<16x256xf32>
    %18 = math.tanh %17 : vector<16x256xf32>
    %cst_9 = arith.constant 1.000000e+00 : f32
    %19 = vector.broadcast %cst_9 : f32 to vector<16x256xf32>
    %20 = arith.addf %19, %18 : vector<16x256xf32>
    %21 = arith.mulf %10, %20 : vector<16x256xf32>
    %c0_10 = arith.constant 0 : index
    %c0_11 = arith.constant 0 : index
    %22 = vector.load %arg8[%c0_10, %c0_11] : memref<16x128xf32, #tpu.memory_space<vmem>>, vector<16x128xf32>
    %23 = arith.truncf %21 : vector<16x256xf32> to vector<16x256xbf16>
    %c0_12 = arith.constant 0 : index
    %c0_13 = arith.constant 0 : index
    %24 = vector.load %arg5[%c0_12, %c0_13] : memref<256x128xbf16, #tpu.memory_space<vmem>>, vector<256x128xbf16>
    %cst_14 = arith.constant dense<0.000000e+00> : vector<16x128xf32>
    %25 = tpu.matmul %23, %24, %cst_14 {dimension_numbers = #tpu.dot_dimension_numbers<[1], [0], [0], [1], [0, 0, 1, 1], [], []>} : vector<16x256xbf16>, vector<256x128xbf16>, vector<16x128xf32> -> vector<16x128xf32>
    %26 = arith.addf %22, %25 : vector<16x128xf32>
    %c0_15 = arith.constant 0 : index
    %c0_16 = arith.constant 0 : index
    %27 = vector.load %arg8[%c0_15, %c0_16] : memref<16x128xf32, #tpu.memory_space<vmem>>, vector<16x128xf32>
    tpu.vector_store %arg8[%c0_15, %c0_16], %26 {strides = array<i32>} : memref<16x128xf32, #tpu.memory_space<vmem>>, vector<16x128xf32>,
    %c0_i32_17 = arith.constant 0 : i32
    %28 = arith.cmpi eq, %arg1, %c0_i32_17 : i32
    %29 = arith.extui %28 : i1 to i32
    %c0_i32_18 = arith.constant 0 : i32
    %30 = arith.cmpi ne, %29, %c0_i32_18 : i32
    scf.if %30 {
      %c0_19 = arith.constant 0 : index
      %c0_20 = arith.constant 0 : index
      %31 = vector.load %arg8[%c0_19, %c0_20] : memref<16x128xf32, #tpu.memory_space<vmem>>, vector<16x128xf32>
      %c0_21 = arith.constant 0 : index
      %c0_22 = arith.constant 0 : index
      %32 = vector.load %arg6[%c0_21, %c0_22] : memref<1x128xf32, #tpu.memory_space<vmem>>, vector<1x128xf32>
      %33 = vector.broadcast %32 : vector<1x128xf32> to vector<16x128xf32>
      %34 = arith.addf %31, %33 : vector<16x128xf32>
      %c0_23 = arith.constant 0 : index
      %c0_24 = arith.constant 0 : index
      %35 = vector.load %arg7[%c0_23, %c0_24] : memref<16x128xf32, #tpu.memory_space<vmem>>, vector<16x128xf32>
      tpu.vector_store %arg7[%c0_23, %c0_24], %34 {strides = array<i32>} : memref<16x128xf32, #tpu.memory_space<vmem>>, vector<16x128xf32>,
    } else {
    }
    return
  }
  func.func @transform_0(%arg0: i32, %arg1: i32) -> (i32, i32) {
    %c0_i32 = arith.constant 0 : i32
    %c0_i32_0 = arith.constant 0 : i32
    return %arg0, %c0_i32 : i32, i32
  }
  func.func @transform_1(%arg0: i32, %arg1: i32) -> (i32, i32) {
    %c0_i32 = arith.constant 0 : i32
    %c0_i32_0 = arith.constant 0 : i32
    return %c0_i32, %arg1 : i32, i32
  }
  func.func @transform_2(%arg0: i32, %arg1: i32) -> (i32, i32) {
    %c0_i32 = arith.constant 0 : i32
    %c0_i32_0 = arith.constant 0 : i32
    return %c0_i32, %arg1 : i32, i32
  }
  func.func @transform_3(%arg0: i32, %arg1: i32) -> (i32, i32) {
    %c0_i32 = arith.constant 0 : i32
    %c0_i32_0 = arith.constant 0 : i32
    return %arg1, %c0_i32 : i32, i32
  }
  func.func @transform_4(%arg0: i32, %arg1: i32) -> (i32, i32) {
    %c0_i32 = arith.constant 0 : i32
    %c0_i32_0 = arith.constant 0 : i32
    %c0_i32_1 = arith.constant 0 : i32
    return %c0_i32, %c0_i32_0 : i32, i32
  }
  func.func @transform_5(%arg0: i32, %arg1: i32) -> (i32, i32) {
    %c0_i32 = arith.constant 0 : i32
    %c0_i32_0 = arith.constant 0 : i32
    return %arg0, %c0_i32 : i32, i32
  }
}

</mosaic_0001>

<llo_original>
// kernel: feed_forward.1
$region0: #{feed_forward.1}
  #allocation0 [shape = 'u32[]', space=smem, size = 0x4, offset = 0x4, fixed_abs, tag = 'smem constant byte address 0x4 - core index']
  #allocation1 [shape = 'u32[144,128]{1,0:T(1,128)}', space=vmem, size = 0x12000, scoped, tag = 'internal scratch']
  #allocation2 [shape = 'f32[16,128]{1,0:T(8,128)}', space=vmem, size = 0x2000, scoped, tag = 'scratch operand']
  %s0 = inlined_call_operand.vmem [shape: bf16[16,128], index: 0, kind: input, shape index: {}]
  %s1 = inlined_call_operand.hbm [shape: bf16[128,256], index: 1, kind: input, shape index: {}]
  %s2 = inlined_call_operand.vmem [shape: f32[1,256], index: 2, kind: input, shape index: {}]
  %s3 = inlined_call_operand.hbm [shape: bf16[256,128], index: 3, kind: input, shape index: {}]
  %s4 = inlined_call_operand.vmem [shape: f32[1,128], index: 4, kind: input, shape index: {}]
  %s5 = inlined_call_operand.hbm [shape: f32[16,128], index: 5, kind: output, shape index: {}]
  %s6 = sld [smem:[#allocation0]]
  $region46: #{feed_forward.1} parent=0
    _
  %s8 = ssub.s32 1, %s6
  %s9 = scalar_select 0, %s8, %s6
  $region1: #{feed_forward.1} parent=0
    #allocation3 [shape = 'u8[65536]{0}', space=vmem, size = 0x10000, scoped, tag = 'input window, operand 1, single buffered']
    #allocation4 [shape = 's32[1]{0}', space=sflag, size = 0x4, scoped, tag = 'scoped memory for feed_forward.1']
    #allocation5 [shape = 's32[1]{0}', space=sflag, size = 0x4, scoped, tag = 'scoped memory for feed_forward.1']
    #allocation6 [shape = 'u8[65536]{0}', space=vmem, size = 0x10000, scoped, tag = 'input window, operand 3, single buffered']
    #allocation7 [shape = 's32[1]{0}', space=sflag, size = 0x4, scoped, tag = 'scoped memory for feed_forward.1']
    #allocation8 [shape = 'u8[8192]{0}', space=vmem, size = 0x2000, scoped, tag = 'output window, operand 0, single buffered']
    %10 = vsyncpa [#allocation4], 0
    %11 = vsyncpa [#allocation7], 0
    %12 = vsyncpa [#allocation5], 0
    // Predicated region
    $region2: #{feed_forward.1} parent=1 // pred_check
      _
    $region3: #{feed_forward.1} parent=1 // pred_check_branch
      %14 = sbr.rel (0) target = $region5
    $region4: #{feed_forward.1} parent=1 // pred_region
      _
    $region5: #{feed_forward.1} parent=1 // pred_fallthru
      _
    // Predicated region
    $region6: #{feed_forward.1} parent=1 // pred_check
      _
    $region7: #{feed_forward.1} parent=1 // pred_check_branch
      %16 = sbr.rel (0) target = $region9
    $region8: #{feed_forward.1} parent=1 // pred_region
      %s18 = ssub.s32 2048, 2048
      %19 = vsyncadd [#allocation4], %s18
      %s20 = sshll.u32 [#allocation3], 4
      %s21 = int_to_ptr.vmem [resolvable:$true] %s20
      %26 = dma.hbm_to_vmem [thread:$0]  %s1, 2048, %s21, [#allocation4], 128, 128, 8
    $region9: #{feed_forward.1} parent=1 // pred_fallthru
      _
    // Predicated region
    $region10: #{feed_forward.1} parent=1 // pred_check
      _
    $region11: #{feed_forward.1} parent=1 // pred_check_branch
      %28 = sbr.rel (0) target = $region13
    $region12: #{feed_forward.1} parent=1 // pred_region
      _
    $region13: #{feed_forward.1} parent=1 // pred_fallthru
      _
    // Predicated region
    $region14: #{feed_forward.1} parent=1 // pred_check
      _
    $region15: #{feed_forward.1} parent=1 // pred_check_branch
      %30 = sbr.rel (0) target = $region17
    $region16: #{feed_forward.1} parent=1 // pred_region
      %s32 = ssub.s32 2048, 2048
      %33 = vsyncadd [#allocation7], %s32
      %s34 = sshll.u32 [#allocation6], 4
      %s35 = int_to_ptr.vmem [resolvable:$true] %s34
      %40 = dma.hbm_to_vmem [thread:$0]  %s3, 2048, %s35, [#allocation7], 64, 64, 4
    $region17: #{feed_forward.1} parent=1 // pred_fallthru
      _
    // Predicated region
    $region18: #{feed_forward.1} parent=1 // pred_check
      _
    $region19: #{feed_forward.1} parent=1 // pred_check_branch
      %42 = sbr.rel (0) target = $region21
    $region20: #{feed_forward.1} parent=1 // pred_region
      _
    $region21: #{feed_forward.1} parent=1 // pred_fallthru
      _
    // Predicated region
    $region22: #{feed_forward.1} parent=1 // pred_check
      _
    $region23: #{feed_forward.1} parent=1 // pred_check_branch
      %44 = sbr.rel (0) target = $region25
    $region24: #{feed_forward.1} parent=1 // pred_region
      %45 = dma.done [#allocation4], 2048
    $region25: #{feed_forward.1} parent=1 // pred_fallthru
      _
    // Predicated region
    $region26: #{feed_forward.1} parent=1 // pred_check
      _
    $region27: #{feed_forward.1} parent=1 // pred_check_branch
      %47 = sbr.rel (0) target = $region29
    $region28: #{feed_forward.1} parent=1 // pred_region
      %48 = dma.done [#allocation7], 2048
    $region29: #{feed_forward.1} parent=1 // pred_fallthru
      _
    %p50 = scmp.eq.s32.totalorder 0, 0
    // Predicated region
    $region30: #{feed_forward.1} parent=1 // pred_check
      %p51 = pneg %p50
    $region31: #{feed_forward.1} parent=1 // pred_check_branch
      %53 = sbr.rel (%p51) target = $region33
    $region32: #{feed_forward.1} parent=1 // pred_region
      %54 = vst [vmem:[#allocation2] sm:$0xff] 0.0
      %55 = vst [vmem:[#allocation2 + $0x8] sm:$0xff] 0.0
    $region33: #{feed_forward.1} parent=1 // pred_fallthru
      _
    %v56 = vld [vmem:[%s0] sm:$0xf]
    %v57 = vld [vmem:[%s0 + $0x4] sm:$0xf]
    %v58 = vld [vmem:[#allocation3] sm:$0xff]
    %v59 = vld [vmem:[#allocation3 + $0x8] sm:$0xff]
    %v60 = vld [vmem:[#allocation3 + $0x10] sm:$0xff]
    %v61 = vld [vmem:[#allocation3 + $0x18] sm:$0xff]
    %v62 = vld [vmem:[#allocation3 + $0x20] sm:$0xff]
    %v63 = vld [vmem:[#allocation3 + $0x28] sm:$0xff]
    %v64 = vld [vmem:[#allocation3 + $0x30] sm:$0xff]
    %v65 = vld [vmem:[#allocation3 + $0x38] sm:$0xff]
    %v66 = vld [vmem:[#allocation3 + $0x40] sm:$0xff]
    %v67 = vld [vmem:[#allocation3 + $0x48] sm:$0xff]
    %v68 = vld [vmem:[#allocation3 + $0x50] sm:$0xff]
    %v69 = vld [vmem:[#allocation3 + $0x58] sm:$0xff]
    %v70 = vld [vmem:[#allocation3 + $0x60] sm:$0xff]
    %v71 = vld [vmem:[#allocation3 + $0x68] sm:$0xff]
    %v72 = vld [vmem:[#allocation3 + $0x70] sm:$0xff]
    %v73 = vld [vmem:[#allocation3 + $0x78] sm:$0xff]
    %v74 = vld [vmem:[%s2] sm:$0x3]
    %v76 = vlaneseq
    %v77 = vshrl.u32 %v76, 7
    %v78 = vsub.s32 0, %v77
    %v79 = vrot.slane %v74, %v78
    %v80 = vlaneseq
    %v81 = vshrl.u32 %v80, 7
    %v82 = vsub.s32 1, %v81
    %v83 = vrot.slane %v74, %v82
    %v88 = vunpack.c.l.b16 %v56
    %v89 = vunpack.c.l.b16 %v57
    %v90 = vpack.c.b16 %v89, %v88
    %v108 = vunpack.c.l.b16 %v58
    %v109 = vunpack.c.h.b16 %v58
    %v110 = vunpack.c.l.b16 %v59
    %v111 = vunpack.c.h.b16 %v59
    %v112 = vunpack.c.l.b16 %v60
    %v113 = vunpack.c.h.b16 %v60
    %v114 = vunpack.c.l.b16 %v61
    %v115 = vunpack.c.h.b16 %v61
    %v116 = vunpack.c.l.b16 %v62
    %v117 = vunpack.c.h.b16 %v62
    %v118 = vunpack.c.l.b16 %v63
    %v119 = vunpack.c.h.b16 %v63
    %v120 = vunpack.c.l.b16 %v64
    %v121 = vunpack.c.h.b16 %v64
    %v122 = vunpack.c.l.b16 %v65
    %v123 = vunpack.c.h.b16 %v65
    %v124 = vunpack.c.l.b16 %v66
    %v125 = vunpack.c.h.b16 %v66
    %v126 = vunpack.c.l.b16 %v67
    %v127 = vunpack.c.h.b16 %v67
    %v128 = vunpack.c.l.b16 %v68
    %v129 = vunpack.c.h.b16 %v68
    %v130 = vunpack.c.l.b16 %v69
    %v131 = vunpack.c.h.b16 %v69
    %v132 = vunpack.c.l.b16 %v70
    %v133 = vunpack.c.h.b16 %v70
    %v134 = vunpack.c.l.b16 %v71
    %v135 = vunpack.c.h.b16 %v71
    %v136 = vunpack.c.l.b16 %v72
    %v137 = vunpack.c.h.b16 %v72
    %v138 = vunpack.c.l.b16 %v73
    %v139 = vunpack.c.h.b16 %v73
    %v140 = vpack.c.b16 %v110, %v108
    %v141 = vpack.c.b16 %v111, %v109
    %v142 = vpack.c.b16 %v114, %v112
    %v143 = vpack.c.b16 %v115, %v113
    %v144 = vpack.c.b16 %v118, %v116
    %v145 = vpack.c.b16 %v119, %v117
    %v146 = vpack.c.b16 %v122, %v120
    %v147 = vpack.c.b16 %v123, %v121
    %v148 = vpack.c.b16 %v126, %v124
    %v149 = vpack.c.b16 %v127, %v125
    %v150 = vpack.c.b16 %v130, %v128
    %v151 = vpack.c.b16 %v131, %v129
    %v152 = vpack.c.b16 %v134, %v132
    %v153 = vpack.c.b16 %v135, %v133
    %v154 = vpack.c.b16 %v138, %v136
    %v155 = vpack.c.b16 %v139, %v137
    %172 = vmatprep.subr.bf16.mxu0 %v155
    %173 = vmatpush1.bf16.msra.mxu0 %v154
    %174 = vmatprep.subr.bf16.mxu0 %v153
    %175 = vmatpush1.bf16.msra.mxu0 %v152
    %176 = vmatprep.subr.bf16.mxu0 %v151
    %177 = vmatpush1.bf16.msra.mxu0 %v150
    %178 = vmatprep.subr.bf16.mxu0 %v149
    %179 = vmatpush1.bf16.msra.mxu0 %v148
    %180 = vmatprep.subr.bf16.mxu0 %v147
    %181 = vmatpush1.bf16.msra.mxu0 %v146
    %182 = vmatprep.subr.bf16.mxu0 %v145
    %183 = vmatpush1.bf16.msra.mxu0 %v144
    %184 = vmatprep.subr.bf16.mxu0 %v143
    %185 = vmatpush1.bf16.msra.mxu0 %v142
    %186 = vmatprep.subr.bf16.mxu0 %v141
    %187 = vmatpush1.bf16.msra.mxu0 %v140
    %188 = vmatprep.subr.bf16.mxu0 0
    %189 = vmatpush2.bf16.msra.mxu0 0
    %190 = vmatprep.subr.bf16.mxu0 0
    %191 = vmatpush2.bf16.msra.mxu0 0
    %192 = vmatprep.subr.bf16.mxu0 0
    %193 = vmatpush2.bf16.msra.mxu0 0
    %194 = vmatprep.subr.bf16.mxu0 0
    %195 = vmatpush2.bf16.msra.mxu0 0
    %196 = vmatprep.subr.bf16.mxu0 0
    %197 = vmatpush2.bf16.msra.mxu0 0
    %198 = vmatprep.subr.bf16.mxu0 0
    %199 = vmatpush2.bf16.msra.mxu0 0
    %200 = vmatprep.subr.bf16.mxu0 0
    %201 = vmatpush2.bf16.msra.mxu0 0
    %202 = vmatprep.subr.bf16.mxu0 0
    %203 = vmatpush2.bf16.msra.mxu0 0
    %204 = vmatprep.mubr.bf16.mxu0 0
    %205 = vmatmul.mubr.bf16.gmra.mxu0 %v90
    %v206 = vpop.f32.mrf.mxu0
    %v207 = vadd.f32 %v79, %v206
    %v208 = vpop.f32.mrf.mxu0
    %v209 = vadd.f32 %v83, %v208
    %v210 = vpop.f32.mrf.mxu0
    %v211 = vadd.f32 %v79, %v210
    %v212 = vpop.f32.mrf.mxu0
    %v213 = vadd.f32 %v83, %v212
    %214 = vdwg.mxu0
    %v215 = vmul.f32 %v207, 0.5
    %v216 = vmul.f32 %v209, 0.5
    %v217 = vmul.f32 %v211, 0.5
    %v218 = vmul.f32 %v213, 0.5
    %v219 = vmul.f32 %v207, 0.044715
    %v220 = vmul.f32 %v209, 0.044715
    %v221 = vmul.f32 %v211, 0.044715
    %v222 = vmul.f32 %v213, 0.044715
    %v223 = vmul.f32 %v219, %v207
    %v224 = vmul.f32 %v220, %v209
    %v225 = vmul.f32 %v221, %v211
    %v226 = vmul.f32 %v222, %v213
    %v227 = vmul.f32 %v223, %v207
    %v228 = vmul.f32 %v224, %v209
    %v229 = vmul.f32 %v225, %v211
    %v230 = vmul.f32 %v226, %v213
    %v231 = vadd.f32 %v207, %v227
    %v232 = vadd.f32 %v209, %v228
    %v233 = vadd.f32 %v211, %v229
    %v234 = vadd.f32 %v213, %v230
    %v235 = vmul.f32 %v231, 0.7978846
    %v236 = vmul.f32 %v232, 0.7978846
    %v237 = vmul.f32 %v233, 0.7978846
    %v238 = vmul.f32 %v234, 0.7978846
    %v239 = vtanh.pop %v235
    %v240 = vtanh.pop %v236
    %v241 = vtanh.pop %v237
    %v242 = vtanh.pop %v238
    %v243 = vadd.f32 %v239, 1.0
    %v244 = vadd.f32 %v240, 1.0
    %v245 = vadd.f32 %v241, 1.0
    %v246 = vadd.f32 %v242, 1.0
    %v247 = vmul.f32 %v215, %v243
    %v248 = vmul.f32 %v216, %v244
    %v249 = vmul.f32 %v217, %v245
    %v250 = vmul.f32 %v218, %v246
    %v251 = vld [vmem:[#allocation2] sm:$0xff]
    %v252 = vld [vmem:[#allocation2 + $0x8] sm:$0xff]
    %v253 = vpack.c.bf16 %v249, %v247
    %v254 = vpack.c.bf16 %v250, %v248
    %v255 = vld [vmem:[#allocation6] sm:$0xf]
    %v256 = vld [vmem:[#allocation6 + $0x4] sm:$0xf]
    %v257 = vld [vmem:[#allocation6 + $0x8] sm:$0xf]
    %v258 = vld [vmem:[#allocation6 + $0xc] sm:$0xf]
    %v259 = vld [vmem:[#allocation6 + $0x10] sm:$0xf]
    %v260 = vld [vmem:[#allocation6 + $0x14] sm:$0xf]
    %v261 = vld [vmem:[#allocation6 + $0x18] sm:$0xf]
    %v262 = vld [vmem:[#allocation6 + $0x1c] sm:$0xf]
    %v263 = vld [vmem:[#allocation6 + $0x20] sm:$0xf]
    %v264 = vld [vmem:[#allocation6 + $0x24] sm:$0xf]
    %v265 = vld [vmem:[#allocation6 + $0x28] sm:$0xf]
    %v266 = vld [vmem:[#allocation6 + $0x2c] sm:$0xf]
    %v267 = vld [vmem:[#allocation6 + $0x30] sm:$0xf]
    %v268 = vld [vmem:[#allocation6 + $0x34] sm:$0xf]
    %v269 = vld [vmem:[#allocation6 + $0x38] sm:$0xf]
    %v270 = vld [vmem:[#allocation6 + $0x3c] sm:$0xf]
    %v271 = vld [vmem:[#allocation6 + $0x40] sm:$0xf]
    %v272 = vld [vmem:[#allocation6 + $0x44] sm:$0xf]
    %v273 = vld [vmem:[#allocation6 + $0x48] sm:$0xf]
    %v274 = vld [vmem:[#allocation6 + $0x4c] sm:$0xf]
    %v275 = vld [vmem:[#allocation6 + $0x50] sm:$0xf]
    %v276 = vld [vmem:[#allocation6 + $0x54] sm:$0xf]
    %v277 = vld [vmem:[#allocation6 + $0x58] sm:$0xf]
    %v278 = vld [vmem:[#allocation6 + $0x5c] sm:$0xf]
    %v279 = vld [vmem:[#allocation6 + $0x60] sm:$0xf]
    %v280 = vld [vmem:[#allocation6 + $0x64] sm:$0xf]
    %v281 = vld [vmem:[#allocation6 + $0x68] sm:$0xf]
    %v282 = vld [vmem:[#allocation6 + $0x6c] sm:$0xf]
    %v283 = vld [vmem:[#allocation6 + $0x70] sm:$0xf]
    %v284 = vld [vmem:[#allocation6 + $0x74] sm:$0xf]
    %v285 = vld [vmem:[#allocation6 + $0x78] sm:$0xf]
    %v286 = vld [vmem:[#allocation6 + $0x7c] sm:$0xf]
    %v319 = vunpack.c.l.b16 %v255
    %v320 = vunpack.c.l.b16 %v256
    %v321 = vunpack.c.l.b16 %v257
    %v322 = vunpack.c.l.b16 %v258
    %v323 = vunpack.c.l.b16 %v259
    %v324 = vunpack.c.l.b16 %v260
    %v325 = vunpack.c.l.b16 %v261
    %v326 = vunpack.c.l.b16 %v262
    %v327 = vunpack.c.l.b16 %v263
    %v328 = vunpack.c.l.b16 %v264
    %v329 = vunpack.c.l.b16 %v265
    %v330 = vunpack.c.l.b16 %v266
    %v331 = vunpack.c.l.b16 %v267
    %v332 = vunpack.c.l.b16 %v268
    %v333 = vunpack.c.l.b16 %v269
    %v334 = vunpack.c.l.b16 %v270
    %v335 = vunpack.c.l.b16 %v271
    %v336 = vunpack.c.l.b16 %v272
    %v337 = vunpack.c.l.b16 %v273
    %v338 = vunpack.c.l.b16 %v274
    %v339 = vunpack.c.l.b16 %v275
    %v340 = vunpack.c.l.b16 %v276
    %v341 = vunpack.c.l.b16 %v277
    %v342 = vunpack.c.l.b16 %v278
    %v343 = vunpack.c.l.b16 %v279
    %v344 = vunpack.c.l.b16 %v280
    %v345 = vunpack.c.l.b16 %v281
    %v346 = vunpack.c.l.b16 %v282
    %v347 = vunpack.c.l.b16 %v283
    %v348 = vunpack.c.l.b16 %v284
    %v349 = vunpack.c.l.b16 %v285
    %v350 = vunpack.c.l.b16 %v286
    %v351 = vpack.c.b16 %v320, %v319
    %v352 = vpack.c.b16 %v322, %v321
    %v353 = vpack.c.b16 %v324, %v323
    %v354 = vpack.c.b16 %v326, %v325
    %v355 = vpack.c.b16 %v328, %v327
    %v356 = vpack.c.b16 %v330, %v329
    %v357 = vpack.c.b16 %v332, %v331
    %v358 = vpack.c.b16 %v334, %v333
    %v359 = vpack.c.b16 %v336, %v335
    %v360 = vpack.c.b16 %v338, %v337
    %v361 = vpack.c.b16 %v340, %v339
    %v362 = vpack.c.b16 %v342, %v341
    %v363 = vpack.c.b16 %v344, %v343
    %v364 = vpack.c.b16 %v346, %v345
    %v365 = vpack.c.b16 %v348, %v347
    %v366 = vpack.c.b16 %v350, %v349
    %383 = vmatprep.subr.bf16.mxu0 0
    %384 = vmatpush1.bf16.msra.mxu0 %v358
    %385 = vmatprep.subr.bf16.mxu0 0
    %386 = vmatpush1.bf16.msra.mxu0 %v357
    %387 = vmatprep.subr.bf16.mxu0 0
    %388 = vmatpush1.bf16.msra.mxu0 %v356
    %389 = vmatprep.subr.bf16.mxu0 0
    %390 = vmatpush1.bf16.msra.mxu0 %v355
    %391 = vmatprep.subr.bf16.mxu0 0
    %392 = vmatpush1.bf16.msra.mxu0 %v354
    %393 = vmatprep.subr.bf16.mxu0 0
    %394 = vmatpush1.bf16.msra.mxu0 %v353
    %395 = vmatprep.subr.bf16.mxu0 0
    %396 = vmatpush1.bf16.msra.mxu0 %v352
    %397 = vmatprep.subr.bf16.mxu0 0
    %398 = vmatpush1.bf16.msra.mxu0 %v351
    %399 = vmatprep.subr.bf16.mxu0 0
    %400 = vmatpush2.bf16.msra.mxu0 %v366
    %401 = vmatprep.subr.bf16.mxu0 0
    %402 = vmatpush2.bf16.msra.mxu0 %v365
    %403 = vmatprep.subr.bf16.mxu0 0
    %404 = vmatpush2.bf16.msra.mxu0 %v364
    %405 = vmatprep.subr.bf16.mxu0 0
    %406 = vmatpush2.bf16.msra.mxu0 %v363
    %407 = vmatprep.subr.bf16.mxu0 0
    %408 = vmatpush2.bf16.msra.mxu0 %v362
    %409 = vmatprep.subr.bf16.mxu0 0
    %410 = vmatpush2.bf16.msra.mxu0 %v361
    %411 = vmatprep.subr.bf16.mxu0 0
    %412 = vmatpush2.bf16.msra.mxu0 %v360
    %413 = vmatprep.subr.bf16.mxu0 0
    %414 = vmatpush2.bf16.msra.mxu0 %v359
    %415 = vmatprep.mubr.bf16.mxu0 %v254
    %416 = vmatmul.mubr.bf16.gmra.mxu0 %v253
    %v417 = vpop.f32.mrf.mxu0
    %v418 = vadd.f32 0.0, %v417
    %v419 = vpop.f32.mrf.mxu0
    %v420 = vpop.f32.mrf.mxu0
    %v421 = vadd.f32 0.0, %v420
    %v422 = vpop.f32.mrf.mxu0
    %423 = vdwg.mxu0
    %v424 = vadd.f32 %v251, %v418
    %v425 = vadd.f32 %v252, %v421
    %426 = vst [vmem:[#allocation2] sm:$0xff] %v424
    %427 = vst [vmem:[#allocation2 + $0x8] sm:$0xff] %v425
    // Predicated region
    $region34: #{feed_forward.1} parent=1 // pred_check
      %p428 = pneg %p50
    $region35: #{feed_forward.1} parent=1 // pred_check_branch
      %430 = sbr.rel (%p428) target = $region37
    $region36: #{feed_forward.1} parent=1 // pred_region
      %v431 = vld [vmem:[#allocation2] sm:$0xff]
      %v432 = vld [vmem:[#allocation2 + $0x8] sm:$0xff]
      %v433 = vld [vmem:[%s4] sm:$0x1]
      %v435 = vlaneseq
      %v436 = vshrl.u32 %v435, 7
      %v437 = vsub.s32 0, %v436
      %v438 = vrot.slane %v433, %v437
      %v440 = vadd.f32 %v431, %v438
      %v441 = vadd.f32 %v432, %v438
      %442 = vst [vmem:[#allocation8] sm:$0xff] %v440
      %443 = vst [vmem:[#allocation8 + $0x8] sm:$0xff] %v441
    $region37: #{feed_forward.1} parent=1 // pred_fallthru
      _
    // Predicated region
    $region38: #{feed_forward.1} parent=1 // pred_check
      _
    $region39: #{feed_forward.1} parent=1 // pred_check_branch
      %445 = sbr.rel (0) target = $region41
    $region40: #{feed_forward.1} parent=1 // pred_region
      %s447 = ssub.s32 256, 256
      %448 = vsyncadd [#allocation5], %s447
      %s449 = sshll.u32 [#allocation8], 4
      %s450 = int_to_ptr.vmem [resolvable:$true] %s449
      %455 = dma.vmem_to_hbm [thread:$0]  %s450, 256, %s5, [#allocation5], 128, 128, 8
    $region41: #{feed_forward.1} parent=1 // pred_fallthru
      _
    // Predicated region
    $region42: #{feed_forward.1} parent=1 // pred_check
      _
    $region43: #{feed_forward.1} parent=1 // pred_check_branch
      %457 = sbr.rel (0) target = $region45
    $region44: #{feed_forward.1} parent=1 // pred_region
      %458 = dma.done [#allocation5], 256
    $region45: #{feed_forward.1} parent=1 // pred_fallthru
      _
    %459 = vsyncpa [#allocation4], 1
    %460 = vsyncpa [#allocation7], 1
    %461 = vsyncpa [#allocation5], 1

</llo_original>
